<compile_context>
chip_gen: v7x
topology: tpu7x:2x2x1
jax: 0.10.0
libtpu: 0.0.40
codegen_flags: <defaults>
</compile_context>

<pallas_src>
import functools

import jax
import jax.numpy as jnp
from jax.experimental import pallas as pl
from jax.experimental.pallas import tpu as pltpu

LN_EPS = 1e-5
_INV_SQRT2 = 0.7071067811865476
_MIB = 1024 * 1024


def _round_up(n, m):
    return ((n + m - 1) // m) * m


def _vmem_budget_bytes():
    """Generation-aware VMEM budget: physical capacity minus Mosaic headroom."""
    phys = 64 * _MIB
    try:
        info = pltpu.get_tpu_info()
        phys = int(getattr(info, "vmem_capacity_bytes", phys) or phys)
    except Exception:
        pass
    if phys >= 128 * _MIB:                    # v5e / v6e: use ~100 of 128 MiB
        return 100 * _MIB
    return max(phys - 8 * _MIB, 32 * _MIB)    # v7x: 64 MiB physical -> ~56 MiB


def _choose_tiles(T, D, H, x_it, w_it, out_it, sub, budget, tm_req=None, th_req=None):
    """Pick (tm, th, Dp, Hp, weights_resident) that fit the VMEM budget."""
    Dp = _round_up(D, 128)
    Hp128 = _round_up(max(H, 1), 128)
    Tsub = _round_up(max(T, 1), sub)

    def fits(tm, th, resident):
        f = 2 * tm * Dp * (x_it + out_it)        # x-in / out tiles, double-buffered
        f += 4 * Dp * th * w_it                  # W1 + W2 blocks, double-buffered
        f += 2 * (3 * Dp + th) * 4               # gamma / beta / b1 / b2
        f += 2 * tm * th * 4                     # f32 hidden intermediate + temps
        if not resident:
            f += tm * Dp * w_it + tm * Dp * 4    # xn cache + f32 accumulator scratch
        return f <= budget

    tm_cands = [1024, 768, 512, 384, 256, 192, 128, 96, 64, 32, 16, 8]
    if tm_req is not None:
        tm_cands = [_round_up(int(tm_req), sub)] + tm_cands
    th_cands = [1024, 768, 512, 384, 256, 128]
    if th_req is not None:
        th_req = min(_round_up(int(th_req), 128), Hp128)
        th_cands = [th_req] + th_cands

    # --- Weights-resident path: th == Hp.  Constant W1/W2 index_maps -> weights are
    # DMA'd exactly once for the entire call; single hidden step, no accumulator RMW.
    if th_req is None or th_req >= Hp128:
        for tm in tm_cands:
            tm_c = min(_round_up(tm, sub), Tsub)
            # Aim for >=2 token tiles so the "parallel" token axis can span both
            # TensorCores (v7x).  Free here: weights aren't re-read per token tile.
            tm_c = min(tm_c, _round_up(-(-max(T, 1) // 2), sub))
            if fits(tm_c, Hp128, resident=True):
                return tm_c, Hp128, Dp, Hp128, True

    # --- Streamed path: weights re-read once per token tile, so prefer the largest
    # token tile first (weight HBM traffic ~ 1/tm), then the largest hidden tile
    # (fewer full (tm, Dp) f32 accumulator read-modify-write passes).
    for tm in tm_cands:
        tm_c = min(_round_up(tm, sub), Tsub)
        for th in th_cands:
            th_c = min(th, Hp128)
            if fits(tm_c, th_c, resident=False):
                return tm_c, th_c, Dp, _round_up(H, th_c), False

    # Pathological fallback (tiny budget): minimal tiles.
    return sub, 128, Dp, _round_up(H, 128), False


def _layernorm_f32(x_ref, g_ref, beta_ref, d_real):
    x = x_ref[...].astype(jnp.float32)
    d_pad = x.shape[-1]
    mu = jnp.sum(x, axis=-1, keepdims=True) * (1.0 / d_real)
    xc = x - mu
    if d_pad != d_real:  # mask padded lanes out of the variance
        col = jax.lax.broadcasted_iota(jnp.int32, (1, d_pad), 1)
        xc = jnp.where(col < d_real, xc, 0.0)
    var = jnp.sum(xc * xc, axis=-1, keepdims=True) * (1.0 / d_real)
    xn = xc * jax.lax.rsqrt(var + LN_EPS)
    return xn * g_ref[...].astype(jnp.float32) + beta_ref[...].astype(jnp.float32)


def _gelu_exact(h):
    # exact (erf) GELU, matching torch.nn.GELU default
    return 0.5 * h * (1.0 + jax.lax.erf(h * _INV_SQRT2))


def _ffn_kernel_fused(x_ref, g_ref, beta_ref, w1_ref, b1_ref, w2_ref, b2_ref,
                      o_ref, *, d_real):
    """Weights-resident path: one hidden step, fully fused per token tile."""
    xn = _layernorm_f32(x_ref, g_ref, beta_ref, d_real).astype(w1_ref.dtype)
    hb = jnp.dot(xn, w1_ref[...], preferred_element_type=jnp.float32)
    hb = _gelu_exact(hb + b1_ref[...].astype(jnp.float32))
    out = jnp.dot(hb.astype(w2_ref.dtype), w2_ref[...], preferred_element_type=jnp.float32)
    o_ref[...] = (out + b2_ref[...].astype(jnp.float32)).astype(o_ref.dtype)


def _ffn_kernel_streamed(x_ref, g_ref, beta_ref, w1_ref, b1_ref, w2_ref, b2_ref,
                         o_ref, xn_ref, acc_ref, *, d_real):
    """Hidden-streamed path: (tm, Dp) f32 accumulator carries the 2nd matmul."""
    h = pl.program_id(1)

    @pl.when(h == 0)
    def _():
        # LayerNorm once per token tile, cached; accumulator seeded with b2 so the
        # epilogue is a plain cast + store.
        xn_ref[...] = _layernorm_f32(x_ref, g_ref, beta_ref, d_real).astype(xn_ref.dtype)
        acc_ref[...] = jnp.zeros_like(acc_ref) + b2_ref[...].astype(jnp.float32)

    hb = jnp.dot(xn_ref[...], w1_ref[...], preferred_element_type=jnp.float32)
    hb = _gelu_exact(hb + b1_ref[...].astype(jnp.float32))
    acc_ref[...] += jnp.dot(hb.astype(w2_ref.dtype), w2_ref[...],
                            preferred_element_type=jnp.float32)

    @pl.when(h == pl.num_programs(1) - 1)
    def _():
        o_ref[...] = acc_ref[...].astype(o_ref.dtype)


def feed_forward(x, gamma, beta, w1, b1, w2, b2, *, tm=None, th=None, matmul_dtype=None):
    """x: (B, S, dim) -> (B, S, dim).  Matches FeedForward.forward (dropout p=0).

    tm / th: optional token / hidden tile overrides (auto-sized from the TPU
    generation's VMEM capacity otherwise).  matmul_dtype: dtype of the MXU operands
    (e.g. jnp.bfloat16 for 2-3x MXU rate + half weight DMA); defaults to the weight
    dtype (exact path).  Accumulation is always f32.
    """
    B, S, D = x.shape
    H = w1.shape[1]
    T = B * S

    matmul_dtype = jnp.dtype(matmul_dtype) if matmul_dtype is not None else jnp.dtype(w1.dtype)
    w_it = matmul_dtype.itemsize
    x_it = jnp.dtype(x.dtype).itemsize
    out_it = x_it
    sub = 16 if matmul_dtype == jnp.bfloat16 else 8

    budget = _vmem_budget_bytes()
    tm, th, Dp, Hp, resident = _choose_tiles(
        T, D, H, x_it, w_it, out_it, sub, budget, tm_req=tm, th_req=th)
    Tp = _round_up(T, tm)

    def pad2(a, r, c):
        if a.shape == (r, c):
            return a  # aligned production shapes: no extra HBM pass
        return jnp.pad(a, ((0, r - a.shape[0]), (0, c - a.shape[1])))

    # Zero padding keeps the math exact: padded gamma/beta/bias entries are 0, padded
    # weight rows/cols are 0, padded token rows are finite and sliced off at the end.
    x2 = pad2(x.reshape(T, D), Tp, Dp)
    g2 = pad2(gamma.reshape(1, D), 1, Dp)
    be2 = pad2(beta.reshape(1, D), 1, Dp)
    w1p = pad2(w1, Dp, Hp).astype(matmul_dtype)
    b1p = pad2(b1.reshape(1, H), 1, Hp)
    w2p = pad2(w2, Hp, Dp).astype(matmul_dtype)
    b2p = pad2(b2.reshape(1, D), 1, Dp)

    n_tok = Tp // tm
    n_hid = Hp // th

    weight_reads = 1 if resident else n_tok      # weights re-streamed per token tile
    cost = pl.CostEstimate(
        flops=4 * Tp * Dp * Hp,                  # two matmuls
        transcendentals=Tp * Hp,                 # erf in GELU
        bytes_accessed=(Tp * Dp * (x_it + out_it)
                        + weight_reads * 2 * Dp * Hp * w_it
                        + (Hp + 3 * Dp) * 4),
    )

    if resident:
        kernel = functools.partial(_ffn_kernel_fused, d_real=D)
        grid = (n_tok,)
        in_specs = [
            pl.BlockSpec((tm, Dp), lambda i: (i, 0)),   # x tile
            pl.BlockSpec((1, Dp), lambda i: (0, 0)),    # LN gamma
            pl.BlockSpec((1, Dp), lambda i: (0, 0)),    # LN beta
            pl.BlockSpec((Dp, Hp), lambda i: (0, 0)),   # W1 (constant -> DMA'd once)
            pl.BlockSpec((1, Hp), lambda i: (0, 0)),    # b1
            pl.BlockSpec((Hp, Dp), lambda i: (0, 0)),   # W2 (constant -> DMA'd once)
            pl.BlockSpec((1, Dp), lambda i: (0, 0)),    # b2
        ]
        out_specs = pl.BlockSpec((tm, Dp), lambda i: (i, 0))
        scratch_shapes = []
        dims = ("parallel",)
    else:
        kernel = functools.partial(_ffn_kernel_streamed, d_real=D)
        grid = (n_tok, n_hid)
        in_specs = [
            pl.BlockSpec((tm, Dp), lambda i, h: (i, 0)),   # x tile
            pl.BlockSpec((1, Dp), lambda i, h: (0, 0)),    # LN gamma
            pl.BlockSpec((1, Dp), lambda i, h: (0, 0)),    # LN beta
            pl.BlockSpec((Dp, th), lambda i, h: (0, h)),   # W1 block (streams over H)
            pl.BlockSpec((1, th), lambda i, h: (0, h)),    # b1 block
            pl.BlockSpec((th, Dp), lambda i, h: (h, 0)),   # W2 block (streams over H)
            pl.BlockSpec((1, Dp), lambda i, h: (0, 0)),    # b2
        ]
        out_specs = pl.BlockSpec((tm, Dp), lambda i, h: (i, 0))
        scratch_shapes = [
            pltpu.VMEM((tm, Dp), matmul_dtype),   # cached LayerNorm output
            pltpu.VMEM((tm, Dp), jnp.float32),    # f32 accumulator for 2nd matmul
        ]
        dims = ("parallel", "arbitrary")

    out = pl.pallas_call(
        kernel,
        out_shape=jax.ShapeDtypeStruct((Tp, Dp), x.dtype),
        grid_spec=pltpu.PrefetchScalarGridSpec(
            num_scalar_prefetch=0,
            grid=grid,
            in_specs=in_specs,
            out_specs=out_specs,
            scratch_shapes=scratch_shapes,
        ),
        compiler_params=pltpu.CompilerParams(
            dimension_semantics=dims,
            vmem_limit_bytes=budget,
        ),
        cost_estimate=cost,
    )(x2, g2, be2, w1p, b1p, w2p, b2p)

    if Tp != T or Dp != D:
        out = out[:T, :D]
    return out.reshape(B, S, D)


def reference(x, gamma, beta, w1, b1, w2, b2):
    """Pure-JAX reference matching the PyTorch module (dropout p=0)."""
    mu = jnp.mean(x, axis=-1, keepdims=True)
    var = jnp.mean((x - mu) ** 2, axis=-1, keepdims=True)
    xn = (x - mu) / jnp.sqrt(var + LN_EPS) * gamma + beta
    h = xn @ w1 + b1
    h = 0.5 * h * (1.0 + jax.lax.erf(h / jnp.sqrt(2.0)))
    return h @ w2 + b2


if __name__ == "__main__":
    # Small demo shapes chosen so feature/token padding, the weights-resident fused
    # path, the hidden-streamed accumulator path, and the bf16 MXU path are all
    # exercised (D=48 -> 128, H=192 -> 256, T=18 -> padded, multiple token tiles).
    B, S, DIM, HIDDEN = 2, 9, 48, 192

    key = jax.random.PRNGKey(0)
    kx, kw1, kb1, kw2, kb2, kg, kbe = jax.random.split(key, 7)

    x = jax.random.normal(kx, (B, S, DIM), dtype=jnp.float32)

    # Deterministic synthetic parameters (shapes follow nn.LayerNorm(dim),
    # nn.Linear(dim, hidden), nn.Linear(hidden, dim)); not a checkpoint load.
    gamma = 1.0 + 0.1 * jax.random.normal(kg, (DIM,), dtype=jnp.float32)
    beta = 0.1 * jax.random.normal(kbe, (DIM,), dtype=jnp.float32)
    w1 = jax.random.normal(kw1, (DIM, HIDDEN), dtype=jnp.float32) * (1.0 / jnp.sqrt(DIM))
    b1 = jax.random.normal(kb1, (HIDDEN,), dtype=jnp.float32) * 0.01
    w2 = jax.random.normal(kw2, (HIDDEN, DIM), dtype=jnp.float32) * (1.0 / jnp.sqrt(HIDDEN))
    b2 = jax.random.normal(kb2, (DIM,), dtype=jnp.float32) * 0.01

    y_ref = reference(x, gamma, beta, w1, b1, w2, b2)

    # 1) auto-tiled: weights-resident fused path (single hidden step, >=2 token tiles)
    y = jax.block_until_ready(feed_forward(x, gamma, beta, w1, b1, w2, b2))
    assert y.shape == (B, S, DIM)
    assert jnp.allclose(y, y_ref, atol=1e-4, rtol=1e-4), "mismatch vs reference (fused path)"

    # 2) forced small tiles: exercises the hidden-streamed f32-accumulator path
    #    (multiple token tiles AND multiple hidden steps, pl.when init/finalize).
    y2 = jax.block_until_ready(feed_forward(x, gamma, beta, w1, b1, w2, b2, tm=16, th=128))
    assert jnp.allclose(y2, y_ref, atol=1e-4, rtol=1e-4), "mismatch vs reference (streamed path)"

    # 3) bf16 MXU operands with f32 accumulation (production fast path): loose tolerance.
    y3 = jax.block_until_ready(
        feed_forward(x, gamma, beta, w1, b1, w2, b2, matmul_dtype=jnp.bfloat16))
    assert jnp.allclose(y3, y_ref, atol=1e-1, rtol=1e-1), "mismatch vs reference (bf16 path)"

    print("KERNEL_OK")
</pallas_src>

<mosaic_0001>
module attributes {stable_mosaic.version = 11 : i64} {
  func.func @_ffn_kernel_fused(%arg0: i32, %arg1: memref<16x128xf32, #tpu.memory_space<vmem>>, %arg2: memref<1x128xf32, #tpu.memory_space<vmem>>, %arg3: memref<1x128xf32, #tpu.memory_space<vmem>>, %arg4: memref<128x256xf32, #tpu.memory_space<vmem>>, %arg5: memref<1x256xf32, #tpu.memory_space<vmem>>, %arg6: memref<256x128xf32, #tpu.memory_space<vmem>>, %arg7: memref<1x128xf32, #tpu.memory_space<vmem>>, %arg8: memref<16x128xf32, #tpu.memory_space<vmem>>) attributes {dimension_semantics = [#tpu.dimension_semantics<parallel>], iteration_bounds = array<i64: 2>, scalar_prefetch = 0 : i64, scratch_operands = 0 : i64, tpu.core_type = #tpu.core_type<tc>, window_params = [{transform_indices = @transform_0, window_bounds = array<i64: 16, 128>}, {pipeline_mode = #tpu.pipeline_mode<synchronous>, transform_indices = @transform_1, window_bounds = array<i64: 1, 128>}, {pipeline_mode = #tpu.pipeline_mode<synchronous>, transform_indices = @transform_2, window_bounds = array<i64: 1, 128>}, {pipeline_mode = #tpu.pipeline_mode<synchronous>, transform_indices = @transform_3, window_bounds = array<i64: 128, 256>}, {pipeline_mode = #tpu.pipeline_mode<synchronous>, transform_indices = @transform_4, window_bounds = array<i64: 1, 256>}, {pipeline_mode = #tpu.pipeline_mode<synchronous>, transform_indices = @transform_5, window_bounds = array<i64: 256, 128>}, {pipeline_mode = #tpu.pipeline_mode<synchronous>, transform_indices = @transform_6, window_bounds = array<i64: 1, 128>}, {transform_indices = @transform_7, window_bounds = array<i64: 16, 128>}]} {
    %c0 = arith.constant 0 : index
    %c0_0 = arith.constant 0 : index
    %0 = vector.load %arg1[%c0, %c0_0] : memref<16x128xf32, #tpu.memory_space<vmem>>, vector<16x128xf32>
    %cst = arith.constant dense<0.000000e+00> : vector<16xf32>
    %1 = vector.multi_reduction <add>, %0, %cst [1] : vector<16x128xf32> to vector<16xf32>
    %2 = vector.shape_cast %1 : vector<16xf32> to vector<16x1xf32>
    %cst_1 = arith.constant 0.020833334 : f32
    %3 = vector.broadcast %cst_1 : f32 to vector<16x1xf32>
    %4 = arith.mulf %2, %3 : vector<16x1xf32>
    %5 = vector.broadcast %4 : vector<16x1xf32> to vector<16x128xf32>
    %6 = arith.subf %0, %5 : vector<16x128xf32>
    %7 = tpu.iota {dimensions = array<i32: 1>} : vector<1x128xi32>
    %c48_i32 = arith.constant 48 : i32
    %8 = vector.broadcast %c48_i32 : i32 to vector<1x128xi32>
    %9 = arith.cmpi slt, %7, %8 : vector<1x128xi32>
    %cst_2 = arith.constant 0.000000e+00 : f32
    %10 = vector.shape_cast %9 : vector<1x128xi1> to vector<1x128xi1>
    %11 = vector.broadcast %10 : vector<1x128xi1> to vector<16x128xi1>
    %12 = vector.broadcast %cst_2 : f32 to vector<16x128xf32>
    %13 = arith.select %11, %6, %12 : vector<16x128xi1>, vector<16x128xf32>
    %14 = arith.mulf %13, %13 : vector<16x128xf32>
    %cst_3 = arith.constant dense<0.000000e+00> : vector<16xf32>
    %15 = vector.multi_reduction <add>, %14, %cst_3 [1] : vector<16x128xf32> to vector<16xf32>
    %16 = vector.shape_cast %15 : vector<16xf32> to vector<16x1xf32>
    %cst_4 = arith.constant 0.020833334 : f32
    %17 = vector.broadcast %cst_4 : f32 to vector<16x1xf32>
    %18 = arith.mulf %16, %17 : vector<16x1xf32>
    %cst_5 = arith.constant 9.99999974E-6 : f32
    %19 = vector.broadcast %cst_5 : f32 to vector<16x1xf32>
    %20 = arith.addf %18, %19 : vector<16x1xf32>
    %21 = math.rsqrt %20 : vector<16x1xf32>
    %22 = vector.broadcast %21 : vector<16x1xf32> to vector<16x128xf32>
    %23 = arith.mulf %13, %22 : vector<16x128xf32>
    %c0_6 = arith.constant 0 : index
    %c0_7 = arith.constant 0 : index
    %24 = vector.load %arg2[%c0_6, %c0_7] : memref<1x128xf32, #tpu.memory_space<vmem>>, vector<1x128xf32>
    %25 = vector.broadcast %24 : vector<1x128xf32> to vector<16x128xf32>
    %26 = arith.mulf %23, %25 : vector<16x128xf32>
    %c0_8 = arith.constant 0 : index
    %c0_9 = arith.constant 0 : index
    %27 = vector.load %arg3[%c0_8, %c0_9] : memref<1x128xf32, #tpu.memory_space<vmem>>, vector<1x128xf32>
    %28 = vector.broadcast %27 : vector<1x128xf32> to vector<16x128xf32>
    %29 = arith.addf %26, %28 : vector<16x128xf32>
    %c0_10 = arith.constant 0 : index
    %c0_11 = arith.constant 0 : index
    %30 = vector.load %arg4[%c0_10, %c0_11] : memref<128x256xf32, #tpu.memory_space<vmem>>, vector<128x256xf32>
    %cst_12 = arith.constant dense<0.000000e+00> : vector<16x256xf32>
    %31 = tpu.matmul %29, %30, %cst_12 {dimension_numbers = #tpu.dot_dimension_numbers<[1], [0], [0], [1], [0, 0, 1, 1], [], []>} : vector<16x128xf32>, vector<128x256xf32>, vector<16x256xf32> -> vector<16x256xf32>
    %c0_13 = arith.constant 0 : index
    %c0_14 = arith.constant 0 : index
    %32 = vector.load %arg5[%c0_13, %c0_14] : memref<1x256xf32, #tpu.memory_space<vmem>>, vector<1x256xf32>
    %33 = vector.broadcast %32 : vector<1x256xf32> to vector<16x256xf32>
    %34 = arith.addf %31, %33 : vector<16x256xf32>
    %cst_15 = arith.constant 5.000000e-01 : f32
    %35 = vector.broadcast %cst_15 : f32 to vector<16x256xf32>
    %36 = arith.mulf %35, %34 : vector<16x256xf32>
    %cst_16 = arith.constant 0.707106769 : f32
    %37 = vector.broadcast %cst_16 : f32 to vector<16x256xf32>
    %38 = arith.mulf %34, %37 : vector<16x256xf32>
    %39 = math.erf %38 : vector<16x256xf32>
    %cst_17 = arith.constant 1.000000e+00 : f32
    %40 = vector.broadcast %cst_17 : f32 to vector<16x256xf32>
    %41 = arith.addf %40, %39 : vector<16x256xf32>
    %42 = arith.mulf %36, %41 : vector<16x256xf32>
    %c0_18 = arith.constant 0 : index
    %c0_19 = arith.constant 0 : index
    %43 = vector.load %arg6[%c0_18, %c0_19] : memref<256x128xf32, #tpu.memory_space<vmem>>, vector<256x128xf32>
    %cst_20 = arith.constant dense<0.000000e+00> : vector<16x128xf32>
    %44 = tpu.matmul %42, %43, %cst_20 {dimension_numbers = #tpu.dot_dimension_numbers<[1], [0], [0], [1], [0, 0, 1, 1], [], []>} : vector<16x256xf32>, vector<256x128xf32>, vector<16x128xf32> -> vector<16x128xf32>
    %c0_21 = arith.constant 0 : index
    %c0_22 = arith.constant 0 : index
    %45 = vector.load %arg7[%c0_21, %c0_22] : memref<1x128xf32, #tpu.memory_space<vmem>>, vector<1x128xf32>
    %46 = vector.broadcast %45 : vector<1x128xf32> to vector<16x128xf32>
    %47 = arith.addf %44, %46 : vector<16x128xf32>
    %c0_23 = arith.constant 0 : index
    %c0_24 = arith.constant 0 : index
    %48 = vector.load %arg8[%c0_23, %c0_24] : memref<16x128xf32, #tpu.memory_space<vmem>>, vector<16x128xf32>
    tpu.vector_store %arg8[%c0_23, %c0_24], %47 {strides = array<i32>} : memref<16x128xf32, #tpu.memory_space<vmem>>, vector<16x128xf32>,
    return
  }
  func.func @transform_0(%arg0: i32) -> (i32, i32) {
    %c0_i32 = arith.constant 0 : i32
    %c0_i32_0 = arith.constant 0 : i32
    return %arg0, %c0_i32 : i32, i32
  }
  func.func @transform_1(%arg0: i32) -> (i32, i32) {
    %c0_i32 = arith.constant 0 : i32
    %c0_i32_0 = arith.constant 0 : i32
    %c0_i32_1 = arith.constant 0 : i32
    return %c0_i32, %c0_i32_0 : i32, i32
  }
  func.func @transform_2(%arg0: i32) -> (i32, i32) {
    %c0_i32 = arith.constant 0 : i32
    %c0_i32_0 = arith.constant 0 : i32
    %c0_i32_1 = arith.constant 0 : i32
    return %c0_i32, %c0_i32_0 : i32, i32
  }
  func.func @transform_3(%arg0: i32) -> (i32, i32) {
    %c0_i32 = arith.constant 0 : i32
    %c0_i32_0 = arith.constant 0 : i32
    %c0_i32_1 = arith.constant 0 : i32
    return %c0_i32, %c0_i32_0 : i32, i32
  }
  func.func @transform_4(%arg0: i32) -> (i32, i32) {
    %c0_i32 = arith.constant 0 : i32
    %c0_i32_0 = arith.constant 0 : i32
    %c0_i32_1 = arith.constant 0 : i32
    return %c0_i32, %c0_i32_0 : i32, i32
  }
  func.func @transform_5(%arg0: i32) -> (i32, i32) {
    %c0_i32 = arith.constant 0 : i32
    %c0_i32_0 = arith.constant 0 : i32
    %c0_i32_1 = arith.constant 0 : i32
    return %c0_i32, %c0_i32_0 : i32, i32
  }
  func.func @transform_6(%arg0: i32) -> (i32, i32) {
    %c0_i32 = arith.constant 0 : i32
    %c0_i32_0 = arith.constant 0 : i32
    %c0_i32_1 = arith.constant 0 : i32
    return %c0_i32, %c0_i32_0 : i32, i32
  }
  func.func @transform_7(%arg0: i32) -> (i32, i32) {
    %c0_i32 = arith.constant 0 : i32
    %c0_i32_0 = arith.constant 0 : i32
    return %arg0, %c0_i32 : i32, i32
  }
}

</mosaic_0001>

<llo_original>
// kernel: tpu_custom_call.1
$region0: #{tpu_custom_call.1}
  #allocation0 [shape = 'u32[]', space=smem, size = 0x4, offset = 0x4, fixed_abs, tag = 'smem constant byte address 0x4 - core index']
  #allocation1 [shape = 'u32[144,128]{1,0:T(1,128)}', space=vmem, size = 0x12000, scoped, tag = 'internal scratch']
  %s0 = inlined_call_operand.hbm [shape: f32[32,128], index: 0, kind: input, shape index: {}]
  %s1 = inlined_call_operand.vmem [shape: f32[1,128], index: 1, kind: input, shape index: {}]
  %s2 = inlined_call_operand.vmem [shape: f32[1,128], index: 2, kind: input, shape index: {}]
  %s3 = inlined_call_operand.hbm [shape: f32[128,256], index: 3, kind: input, shape index: {}]
  %s4 = inlined_call_operand.vmem [shape: f32[1,256], index: 4, kind: input, shape index: {}]
  %s5 = inlined_call_operand.hbm [shape: f32[256,128], index: 5, kind: input, shape index: {}]
  %s6 = inlined_call_operand.vmem [shape: f32[1,128], index: 6, kind: input, shape index: {}]
  %s7 = inlined_call_operand.hbm [shape: f32[32,128], index: 7, kind: output, shape index: {}]
  %s8 = sld [smem:[#allocation0]]
  $region73: #{tpu_custom_call.1} parent=0
    _
  %s10 = ssub.s32 1, %s8
  %s11 = scalar_select 0, %s10, %s8
  $region1: #{tpu_custom_call.1} parent=0
    #allocation2 [shape = 'u8[16384]{0}', space=vmem, size = 0x4000, scoped, tag = 'input window, operand 0']
    #allocation3 [shape = 's32[2]{0}', space=sflag, size = 0x8, scoped, tag = 'scoped memory for tpu_custom_call.1']
    #allocation4 [shape = 's32[2]{0}', space=sflag, size = 0x8, scoped, tag = 'scoped memory for tpu_custom_call.1']
    #allocation5 [shape = 'u8[131072]{0}', space=vmem, size = 0x20000, scoped, tag = 'input window, operand 3, single buffered']
    #allocation6 [shape = 's32[1]{0}', space=sflag, size = 0x4, scoped, tag = 'scoped memory for tpu_custom_call.1']
    #allocation7 [shape = 'u8[131072]{0}', space=vmem, size = 0x20000, scoped, tag = 'input window, operand 5, single buffered']
    #allocation8 [shape = 'u8[16384]{0}', space=vmem, size = 0x4000, scoped, tag = 'output window, operand 0']
    %12 = vsyncpa [#allocation3], 0
    %s13 = scalar_lea.sflag [#allocation3], 1
    %14 = vsyncpa %s13, 0
    %15 = vsyncpa [#allocation6], 0
    %16 = vsyncpa [#allocation4], 0
    %s17 = scalar_lea.sflag [#allocation4], 1
    %18 = vsyncpa %s17, 0
    loop: start=0, step=1, limit=4
    $region2: #{tpu_custom_call.1} parent=1 // loop_pre_header
      _
    $region3: #{tpu_custom_call.1} parent=1 // loop_header
      %s20 = sphi 0, %s24
      %p21 = scmp.ge.s32.totalorder %s20, 4
      %s30 = sphi 0, %s32
      %s33 = sphi 0, %s30
      %s34 = sphi 0, %s33
      %s50 = sphi 0, %s34
      %s54 = sphi 0, %s54
      %s56 = sphi 0, %s54
      %s57 = sphi 0, %s56
      %s71 = sphi 0, %s57
      %s75 = sphi 0, %s75
      %s77 = sphi 0, %s75
      %s78 = sphi 0, %s77
      %s92 = sphi 0, %s78
      %s96 = sphi 0, %s96
      %s98 = sphi 0, %s96
      %s99 = sphi 0, %s98
      %s113 = sphi 0, %s99
      %s117 = sphi 0, %s117
      %s119 = sphi 0, %s117
      %s120 = sphi 0, %s119
      %s134 = sphi 0, %s120
      %s138 = sphi 0, %s138
      %s140 = sphi 0, %s138
      %s141 = sphi 0, %s140
      %s155 = sphi 0, %s141
      %s159 = sphi 0, %s159
      %s161 = sphi 0, %s159
      %s162 = sphi 0, %s161
      %s176 = sphi 0, %s162
      %s182 = sphi 0, %s184
      %s185 = sphi 0, %s182
      %s186 = sphi 0, %s185
      %s202 = sphi 0, %s186
    $region4: #{tpu_custom_call.1} parent=1 // loop_header_branch
      %23 = sbr.rel (%p21) target = $region8
    $region5: #{tpu_custom_call.1} parent=1 // loop_body
      %s25 = ssub.s32 %s20, 1
      %s26 = ssub.s32 %s20, 2
      %s27 = sadd.s32 %s20, 1
      %s28 = ssub.s32 %s20, %s27
      %p29 = scmp.eq.s32.totalorder %s28, 0
      %s31 = sadd.s32 %s30, 1
      %s32 = scalar_select %p29, %s30, %s31
      %p35 = pneg %p29
      %p36 = scmp.eq.s32.totalorder %s20, 1
      %p37 = por %p35, %p36
      %p38 = scmp.ne.s32.totalorder %s30, %s33
      %p39 = scmp.eq.s32.totalorder %s20, 0
      %p40 = por %p38, %p39
      %p41 = scmp.ne.s32.totalorder %s30, %s33
      %p42 = scmp.eq.s32.totalorder %s25, 1
      %p43 = por %p41, %p42
      %p44 = scmp.ne.s32.totalorder %s33, %s34
      %p45 = scmp.eq.s32.totalorder %s25, 0
      %p46 = por %p44, %p45
      %p47 = scmp.ne.s32.totalorder %s33, %s34
      %p48 = scmp.eq.s32.totalorder %s26, 1
      %p49 = por %p47, %p48
      %p51 = scmp.ne.s32.totalorder %s34, %s50
      %p52 = scmp.eq.s32.totalorder %s26, 0
      %p53 = por %p51, %p52
      %s55 = sadd.s32 %s54, 1
      %p58 = scmp.eq.s32.totalorder %s20, 1
      %p59 = scmp.ne.s32.totalorder %s54, %s56
      %p60 = scmp.eq.s32.totalorder %s20, 0
      %p61 = por %p59, %p60
      %p62 = scmp.ne.s32.totalorder %s54, %s56
      %p63 = scmp.eq.s32.totalorder %s25, 1
      %p64 = por %p62, %p63
      %p65 = scmp.ne.s32.totalorder %s56, %s57
      %p66 = scmp.eq.s32.totalorder %s25, 0
      %p67 = por %p65, %p66
      %p68 = scmp.ne.s32.totalorder %s56, %s57
      %p69 = scmp.eq.s32.totalorder %s26, 1
      %p70 = por %p68, %p69
      %p72 = scmp.ne.s32.totalorder %s57, %s71
      %p73 = scmp.eq.s32.totalorder %s26, 0
      %p74 = por %p72, %p73
      %s76 = sadd.s32 %s75, 1
      %p79 = scmp.eq.s32.totalorder %s20, 1
      %p80 = scmp.ne.s32.totalorder %s75, %s77
      %p81 = scmp.eq.s32.totalorder %s20, 0
      %p82 = por %p80, %p81
      %p83 = scmp.ne.s32.totalorder %s75, %s77
      %p84 = scmp.eq.s32.totalorder %s25, 1
      %p85 = por %p83, %p84
      %p86 = scmp.ne.s32.totalorder %s77, %s78
      %p87 = scmp.eq.s32.totalorder %s25, 0
      %p88 = por %p86, %p87
      %p89 = scmp.ne.s32.totalorder %s77, %s78
      %p90 = scmp.eq.s32.totalorder %s26, 1
      %p91 = por %p89, %p90
      %p93 = scmp.ne.s32.totalorder %s78, %s92
      %p94 = scmp.eq.s32.totalorder %s26, 0
      %p95 = por %p93, %p94
      %s97 = sadd.s32 %s96, 1
      %p100 = scmp.eq.s32.totalorder %s20, 1
      %p101 = scmp.ne.s32.totalorder %s96, %s98
      %p102 = scmp.eq.s32.totalorder %s20, 0
      %p103 = por %p101, %p102
      %p104 = scmp.ne.s32.totalorder %s96, %s98
      %p105 = scmp.eq.s32.totalorder %s25, 1
      %p106 = por %p104, %p105
      %p107 = scmp.ne.s32.totalorder %s98, %s99
      %p108 = scmp.eq.s32.totalorder %s25, 0
      %p109 = por %p107, %p108
      %p110 = scmp.ne.s32.totalorder %s98, %s99
      %p111 = scmp.eq.s32.totalorder %s26, 1
      %p112 = por %p110, %p111
      %p114 = scmp.ne.s32.totalorder %s99, %s113
      %p115 = scmp.eq.s32.totalorder %s26, 0
      %p116 = por %p114, %p115
      %s118 = sadd.s32 %s117, 1
      %p121 = scmp.eq.s32.totalorder %s20, 1
      %p122 = scmp.ne.s32.totalorder %s117, %s119
      %p123 = scmp.eq.s32.totalorder %s20, 0
      %p124 = por %p122, %p123
      %p125 = scmp.ne.s32.totalorder %s117, %s119
      %p126 = scmp.eq.s32.totalorder %s25, 1
      %p127 = por %p125, %p126
      %p128 = scmp.ne.s32.totalorder %s119, %s120
      %p129 = scmp.eq.s32.totalorder %s25, 0
      %p130 = por %p128, %p129
      %p131 = scmp.ne.s32.totalorder %s119, %s120
      %p132 = scmp.eq.s32.totalorder %s26, 1
      %p133 = por %p131, %p132
      %p135 = scmp.ne.s32.totalorder %s120, %s134
      %p136 = scmp.eq.s32.totalorder %s26, 0
      %p137 = por %p135, %p136
      %s139 = sadd.s32 %s138, 1
      %p142 = scmp.eq.s32.totalorder %s20, 1
      %p143 = scmp.ne.s32.totalorder %s138, %s140
      %p144 = scmp.eq.s32.totalorder %s20, 0
      %p145 = por %p143, %p144
      %p146 = scmp.ne.s32.totalorder %s138, %s140
      %p147 = scmp.eq.s32.totalorder %s25, 1
      %p148 = por %p146, %p147
      %p149 = scmp.ne.s32.totalorder %s140, %s141
      %p150 = scmp.eq.s32.totalorder %s25, 0
      %p151 = por %p149, %p150
      %p152 = scmp.ne.s32.totalorder %s140, %s141
      %p153 = scmp.eq.s32.totalorder %s26, 1
      %p154 = por %p152, %p153
      %p156 = scmp.ne.s32.totalorder %s141, %s155
      %p157 = scmp.eq.s32.totalorder %s26, 0
      %p158 = por %p156, %p157
      %s160 = sadd.s32 %s159, 1
      %p163 = scmp.eq.s32.totalorder %s20, 1
      %p164 = scmp.ne.s32.totalorder %s159, %s161
      %p165 = scmp.eq.s32.totalorder %s20, 0
      %p166 = por %p164, %p165
      %p167 = scmp.ne.s32.totalorder %s159, %s161
      %p168 = scmp.eq.s32.totalorder %s25, 1
      %p169 = por %p167, %p168
      %p170 = scmp.ne.s32.totalorder %s161, %s162
      %p171 = scmp.eq.s32.totalorder %s25, 0
      %p172 = por %p170, %p171
      %p173 = scmp.ne.s32.totalorder %s161, %s162
      %p174 = scmp.eq.s32.totalorder %s26, 1
      %p175 = por %p173, %p174
      %p177 = scmp.ne.s32.totalorder %s162, %s176
      %p178 = scmp.eq.s32.totalorder %s26, 0
      %p179 = por %p177, %p178
      %s180 = ssub.s32 %s20, %s27
      %p181 = scmp.eq.s32.totalorder %s180, 0
      %s183 = sadd.s32 %s182, 1
      %s184 = scalar_select %p181, %s182, %s183
      %p187 = pneg %p181
      %p188 = scmp.eq.s32.totalorder %s20, 1
      %p189 = por %p187, %p188
      %p190 = scmp.ne.s32.totalorder %s182, %s185
      %p191 = scmp.eq.s32.totalorder %s20, 0
      %p192 = por %p190, %p191
      %p193 = scmp.ne.s32.totalorder %s182, %s185
      %p194 = scmp.eq.s32.totalorder %s25, 1
      %p195 = por %p193, %p194
      %p196 = scmp.ne.s32.totalorder %s185, %s186
      %p197 = scmp.eq.s32.totalorder %s25, 0
      %p198 = por %p196, %p197
      %p199 = scmp.ne.s32.totalorder %s185, %s186
      %p200 = scmp.eq.s32.totalorder %s26, 1
      %p201 = por %p199, %p200
      %p203 = scmp.ne.s32.totalorder %s186, %s202
      %p204 = scmp.eq.s32.totalorder %s26, 0
      %p205 = por %p203, %p204
      %p206 = scmp.le.s32.totalorder 1, %s20
      %p207 = scmp.lt.s32.totalorder %s20, 3
      %p208 = pnand %p206, %p207
      %p209 = pneg %p208
      // Predicated region
      $region9: #{tpu_custom_call.1} parent=5 // pred_check
        _
      $region10: #{tpu_custom_call.1} parent=5 // pred_check_branch
        %211 = sbr.rel (%p208) target = $region12
      $region11: #{tpu_custom_call.1} parent=5 // pred_region
        %s212 = ssub.s32 %s20, 1
        // Predicated region
        $region13: #{tpu_custom_call.1} parent=11 // pred_check
          %p213 = pneg %p67
        $region14: #{tpu_custom_call.1} parent=11 // pred_check_branch
          %215 = sbr.rel (%p213) target = $region16
        $region15: #{tpu_custom_call.1} parent=11 // pred_region
          _
        $region16: #{tpu_custom_call.1} parent=11 // pred_fallthru
          _
        // Predicated region
        $region17: #{tpu_custom_call.1} parent=11 // pred_check
          %p216 = pneg %p88
        $region18: #{tpu_custom_call.1} parent=11 // pred_check_branch
          %218 = sbr.rel (%p216) target = $region20
        $region19: #{tpu_custom_call.1} parent=11 // pred_region
          _
        $region20: #{tpu_custom_call.1} parent=11 // pred_fallthru
          _
        // Predicated region
        $region21: #{tpu_custom_call.1} parent=11 // pred_check
          %p219 = pneg %p109
        $region22: #{tpu_custom_call.1} parent=11 // pred_check_branch
          %221 = sbr.rel (%p219) target = $region24
        $region23: #{tpu_custom_call.1} parent=11 // pred_region
          %s223 = ssub.s32 4096, 4096
          %224 = vsyncadd [#allocation6], %s223
          %s225 = sshll.u32 [#allocation5], 4
          %s226 = int_to_ptr.vmem [resolvable:$true] %s225
          %231 = dma.hbm_to_vmem [thread:$0]  %s3, 4096, %s226, [#allocation6], 256, 256, 16
        $region24: #{tpu_custom_call.1} parent=11 // pred_fallthru
          _
        // Predicated region
        $region25: #{tpu_custom_call.1} parent=11 // pred_check
          %p232 = pneg %p130
        $region26: #{tpu_custom_call.1} parent=11 // pred_check_branch
          %234 = sbr.rel (%p232) target = $region28
        $region27: #{tpu_custom_call.1} parent=11 // pred_region
          _
        $region28: #{tpu_custom_call.1} parent=11 // pred_fallthru
          _
        // Predicated region
        $region29: #{tpu_custom_call.1} parent=11 // pred_check
          %p235 = pneg %p151
        $region30: #{tpu_custom_call.1} parent=11 // pred_check_branch
          %237 = sbr.rel (%p235) target = $region32
        $region31: #{tpu_custom_call.1} parent=11 // pred_region
          %s239 = ssub.s32 4096, 4096
          %240 = vsyncadd [#allocation6], %s239
          %s241 = sshll.u32 [#allocation7], 4
          %s242 = int_to_ptr.vmem [resolvable:$true] %s241
          %247 = dma.hbm_to_vmem [thread:$0]  %s5, 4096, %s242, [#allocation6], 128, 128, 8
        $region32: #{tpu_custom_call.1} parent=11 // pred_fallthru
          _
        // Predicated region
        $region33: #{tpu_custom_call.1} parent=11 // pred_check
          %p248 = pneg %p172
        $region34: #{tpu_custom_call.1} parent=11 // pred_check_branch
          %250 = sbr.rel (%p248) target = $region36
        $region35: #{tpu_custom_call.1} parent=11 // pred_region
          _
        $region36: #{tpu_custom_call.1} parent=11 // pred_fallthru
          _
      $region12: #{tpu_custom_call.1} parent=5 // pred_fallthru
        _
      %p251 = scmp.lt.s32.totalorder %s20, 2
      // Predicated region
      $region37: #{tpu_custom_call.1} parent=5 // pred_check
        %p252 = pneg %p251
      $region38: #{tpu_custom_call.1} parent=5 // pred_check_branch
        %254 = sbr.rel (%p252) target = $region40
      $region39: #{tpu_custom_call.1} parent=5 // pred_region
        // Predicated region
        $region41: #{tpu_custom_call.1} parent=39 // pred_check
          %p255 = pneg %p40
        $region42: #{tpu_custom_call.1} parent=39 // pred_check_branch
          %257 = sbr.rel (%p255) target = $region44
        $region43: #{tpu_custom_call.1} parent=39 // pred_region
          %s258 = sand.u32 %s30, 1
          %s259 = scalar_lea.sflag [#allocation3], %s258
          %s260 = sand.u32 %s30, 1
          %s261 = smul.addr %s260, 16
          %s262 = scalar_lea.vmem [#allocation2], %s261
          %s263 = smul.u32 2, %s20
          %s265 = ssub.s32 256, 256
          %266 = vsyncadd %s259, %s265
          %s267 = smul.addr %s263, 128
          %s268 = scalar_lea.hbm %s0, %s267
          %s269 = sshll.u32 %s262, 4
          %s270 = int_to_ptr.vmem [resolvable:$true] %s269
          %275 = dma.hbm_to_vmem [thread:$0]  %s268, 256, %s270, %s259, 128, 128, 8
        $region44: #{tpu_custom_call.1} parent=39 // pred_fallthru
          _
      $region40: #{tpu_custom_call.1} parent=5 // pred_fallthru
        _
      %p276 = scmp.le.s32.totalorder 1, %s20
      %p277 = scmp.lt.s32.totalorder %s20, 3
      %p278 = pnand %p276, %p277
      %p279 = pneg %p278
      // Predicated region
      $region45: #{tpu_custom_call.1} parent=5 // pred_check
        _
      $region46: #{tpu_custom_call.1} parent=5 // pred_check_branch
        %281 = sbr.rel (%p278) target = $region48
      $region47: #{tpu_custom_call.1} parent=5 // pred_region
        %s282 = ssub.s32 %s20, 1
        %s283 = sand.u32 %s33, 1
        %s284 = scalar_lea.sflag [#allocation3], %s283
        %s285 = sand.u32 %s33, 1
        %s286 = smul.addr %s285, 16
        %s287 = scalar_lea.vmem [#allocation2], %s286
        // Predicated region
        $region49: #{tpu_custom_call.1} parent=47 // pred_check
          %p288 = pneg %p46
        $region50: #{tpu_custom_call.1} parent=47 // pred_check_branch
          %290 = sbr.rel (%p288) target = $region52
        $region51: #{tpu_custom_call.1} parent=47 // pred_region
          %291 = dma.done %s284, 256
        $region52: #{tpu_custom_call.1} parent=47 // pred_fallthru
          _
        // Predicated region
        $region53: #{tpu_custom_call.1} parent=47 // pred_check
          %p292 = pneg %p109
        $region54: #{tpu_custom_call.1} parent=47 // pred_check_branch
          %294 = sbr.rel (%p292) target = $region56
        $region55: #{tpu_custom_call.1} parent=47 // pred_region
          %295 = dma.done [#allocation6], 4096
        $region56: #{tpu_custom_call.1} parent=47 // pred_fallthru
          _
        // Predicated region
        $region57: #{tpu_custom_call.1} parent=47 // pred_check
          %p296 = pneg %p151
        $region58: #{tpu_custom_call.1} parent=47 // pred_check_branch
          %298 = sbr.rel (%p296) target = $region60
        $region59: #{tpu_custom_call.1} parent=47 // pred_region
          %299 = dma.done [#allocation6], 4096
        $region60: #{tpu_custom_call.1} parent=47 // pred_fallthru
          _
        %s300 = sand.u32 %s33, 1
        %s301 = scalar_lea.sflag [#allocation3], %s300
        %s302 = sand.u32 %s33, 1
        %s303 = smul.addr %s302, 16
        %s304 = scalar_lea.vmem [#allocation2], %s303
        %p305 = pneg %p46
        %p306 = pneg %p43
        %p307 = pneg %p67
        %p308 = pneg %p64
        %p309 = pneg %p88
        %p310 = pneg %p85
        %p311 = pneg %p109
        %p312 = pneg %p106
        %p313 = pneg %p130
        %p314 = pneg %p127
        %p315 = pneg %p151
        %p316 = pneg %p148
        %p317 = pneg %p172
        %p318 = pneg %p169
        %p319 = pneg %p198
        %p320 = pneg %p195
        %s321 = sand.u32 %s185, 1
        %s322 = scalar_lea.sflag [#allocation4], %s321
        %s323 = sand.u32 %s185, 1
        %s324 = smul.addr %s323, 16
        %s325 = scalar_lea.vmem [#allocation8], %s324
        %s326 = smul.u32 2, %s25
        %s327 = smul.u32 2, %s25
        %v328 = vld [vmem:[%s287] sm:$0xff]
        %v329 = vld [vmem:[%s287 + $0x8] sm:$0xff]
        %330 = vadd.xlane.f32.xlu0 %v328
        %v331 = vpop.xlane.xlu0 %330
        %332 = vadd.xlane.f32.xlu0 %v329
        %v333 = vpop.xlane.xlu0 %332
        %v334 = vmul.f32 %v331, 0.020833334
        %v335 = vmul.f32 %v333, 0.020833334
        %v336 = vsub.f32 %v328, %v334
        %v337 = vsub.f32 %v329, %v335
        %v338 = vlaneseq
        %v339 = vand.u32 %v338, 127
        %vm340 = vcmp.lt.s32.totalorder %v339, 48
        %v341 = vsel %vm340, 1, 0
        %vm342 = vcmp.eq.s32.totalorder %v341, 1
        %v343 = vsel %vm342, %v336, 0.0
        %v344 = vsel %vm342, %v337, 0.0
        %v345 = vmul.f32 %v343, %v343
        %v346 = vmul.f32 %v344, %v344
        %347 = vadd.xlane.f32.xlu0 %v345
        %v348 = vpop.xlane.xlu0 %347
        %349 = vadd.xlane.f32.xlu0 %v346
        %v350 = vpop.xlane.xlu0 %349
        %v351 = vmul.f32 %v348, 0.020833334
        %v352 = vmul.f32 %v350, 0.020833334
        %v353 = vadd.f32 %v351, 1e-05
        %v354 = vadd.f32 %v352, 1e-05
        %v355 = vrsqrt.pop %v353
        %v356 = vrsqrt.pop %v354
        %v357 = vmul.f32 %v343, %v355
        %v358 = vmul.f32 %v344, %v356
        %v359 = vld [vmem:[%s1] sm:$0x1]
        %v361 = vlaneseq
        %v362 = vshrl.u32 %v361, 7
        %v363 = vsub.s32 0, %v362
        %v364 = vrot.slane %v359, %v363
        %v366 = vmul.f32 %v357, %v364
        %v367 = vmul.f32 %v358, %v364
        %v368 = vld [vmem:[%s2] sm:$0x1]
        %v370 = vlaneseq
        %v371 = vshrl.u32 %v370, 7
        %v372 = vsub.s32 0, %v371
        %v373 = vrot.slane %v368, %v372
        %v375 = vadd.f32 %v366, %v373
        %v376 = vadd.f32 %v367, %v373
        %v377 = vld [vmem:[#allocation5] sm:$0xff]
        %v378 = vld [vmem:[#allocation5 + $0x8] sm:$0xff]
        %v379 = vld [vmem:[#allocation5 + $0x10] sm:$0xff]
        %v380 = vld [vmem:[#allocation5 + $0x18] sm:$0xff]
        %v381 = vld [vmem:[#allocation5 + $0x20] sm:$0xff]
        %v382 = vld [vmem:[#allocation5 + $0x28] sm:$0xff]
        %v383 = vld [vmem:[#allocation5 + $0x30] sm:$0xff]
        %v384 = vld [vmem:[#allocation5 + $0x38] sm:$0xff]
        %v385 = vld [vmem:[#allocation5 + $0x40] sm:$0xff]
        %v386 = vld [vmem:[#allocation5 + $0x48] sm:$0xff]
        %v387 = vld [vmem:[#allocation5 + $0x50] sm:$0xff]
        %v388 = vld [vmem:[#allocation5 + $0x58] sm:$0xff]
        %v389 = vld [vmem:[#allocation5 + $0x60] sm:$0xff]
        %v390 = vld [vmem:[#allocation5 + $0x68] sm:$0xff]
        %v391 = vld [vmem:[#allocation5 + $0x70] sm:$0xff]
        %v392 = vld [vmem:[#allocation5 + $0x78] sm:$0xff]
        %v393 = vld [vmem:[#allocation5 + $0x80] sm:$0xff]
        %v394 = vld [vmem:[#allocation5 + $0x88] sm:$0xff]
        %v395 = vld [vmem:[#allocation5 + $0x90] sm:$0xff]
        %v396 = vld [vmem:[#allocation5 + $0x98] sm:$0xff]
        %v397 = vld [vmem:[#allocation5 + $0xa0] sm:$0xff]
        %v398 = vld [vmem:[#allocation5 + $0xa8] sm:$0xff]
        %v399 = vld [vmem:[#allocation5 + $0xb0] sm:$0xff]
        %v400 = vld [vmem:[#allocation5 + $0xb8] sm:$0xff]
        %v401 = vld [vmem:[#allocation5 + $0xc0] sm:$0xff]
        %v402 = vld [vmem:[#allocation5 + $0xc8] sm:$0xff]
        %v403 = vld [vmem:[#allocation5 + $0xd0] sm:$0xff]
        %v404 = vld [vmem:[#allocation5 + $0xd8] sm:$0xff]
        %v405 = vld [vmem:[#allocation5 + $0xe0] sm:$0xff]
        %v406 = vld [vmem:[#allocation5 + $0xe8] sm:$0xff]
        %v407 = vld [vmem:[#allocation5 + $0xf0] sm:$0xff]
        %v408 = vld [vmem:[#allocation5 + $0xf8] sm:$0xff]
        %v409 = vld [vmem:[%s4] sm:$0x3]
        %v411 = vlaneseq
        %v412 = vshrl.u32 %v411, 7
        %v413 = vsub.s32 0, %v412
        %v414 = vrot.slane %v409, %v413
        %v415 = vlaneseq
        %v416 = vshrl.u32 %v415, 7
        %v417 = vsub.s32 1, %v416
        %v418 = vrot.slane %v409, %v417
        %421 = vmatprep.subr.mxu0 %v378
        %422 = vmatpush1.msra.mxu0 %v377
        %423 = vmatprep.subr.mxu0 %v380
        %424 = vmatpush1.msra.mxu0 %v379
        %425 = vmatprep.subr.mxu0 %v382
        %426 = vmatpush1.msra.mxu0 %v381
        %427 = vmatprep.subr.mxu0 %v384
        %428 = vmatpush1.msra.mxu0 %v383
        %429 = vmatprep.subr.mxu0 %v386
        %430 = vmatpush1.msra.mxu0 %v385
        %431 = vmatprep.subr.mxu0 %v388
        %432 = vmatpush1.msra.mxu0 %v387
        %433 = vmatprep.subr.mxu0 %v390
        %434 = vmatpush1.msra.mxu0 %v389
        %435 = vmatprep.subr.mxu0 %v392
        %436 = vmatpush1.msra.mxu0 %v391
        %437 = vmatprep.subr.mxu0 %v394
        %438 = vmatpush1.msra.mxu0 %v393
        %439 = vmatprep.subr.mxu0 %v396
        %440 = vmatpush1.msra.mxu0 %v395
        %441 = vmatprep.subr.mxu0 %v398
        %442 = vmatpush1.msra.mxu0 %v397
        %443 = vmatprep.subr.mxu0 %v400
        %444 = vmatpush1.msra.mxu0 %v399
        %445 = vmatprep.subr.mxu0 %v402
        %446 = vmatpush1.msra.mxu0 %v401
        %447 = vmatprep.subr.mxu0 %v404
        %448 = vmatpush1.msra.mxu0 %v403
        %449 = vmatprep.subr.mxu0 %v406
        %450 = vmatpush1.msra.mxu0 %v405
        %451 = vmatprep.subr.mxu0 %v408
        %452 = vmatpush1.msra.mxu0 %v407
        %453 = vmatprep.subr.mxu0 0.0
        %454 = vmatpush1.msra.mxu0 0.0
        %455 = vmatprep.subr.mxu0 0.0
        %456 = vmatpush1.msra.mxu0 0.0
        %457 = vmatprep.subr.mxu0 0.0
        %458 = vmatpush1.msra.mxu0 0.0
        %459 = vmatprep.subr.mxu0 0.0
        %460 = vmatpush1.msra.mxu0 0.0
        %461 = vmatprep.subr.mxu0 0.0
        %462 = vmatpush1.msra.mxu0 0.0
        %463 = vmatprep.subr.mxu0 0.0
        %464 = vmatpush1.msra.mxu0 0.0
        %465 = vmatprep.subr.mxu0 0.0
        %466 = vmatpush1.msra.mxu0 0.0
        %467 = vmatprep.subr.mxu0 0.0
        %468 = vmatpush1.msra.mxu0 0.0
        %469 = vmatprep.subr.mxu0 0.0
        %470 = vmatpush1.msra.mxu0 0.0
        %471 = vmatprep.subr.mxu0 0.0
        %472 = vmatpush1.msra.mxu0 0.0
        %473 = vmatprep.subr.mxu0 0.0
        %474 = vmatpush1.msra.mxu0 0.0
        %475 = vmatprep.subr.mxu0 0.0
        %476 = vmatpush1.msra.mxu0 0.0
        %477 = vmatprep.subr.mxu0 0.0
        %478 = vmatpush1.msra.mxu0 0.0
        %479 = vmatprep.subr.mxu0 0.0
        %480 = vmatpush1.msra.mxu0 0.0
        %481 = vmatprep.subr.mxu0 0.0
        %482 = vmatpush1.msra.mxu0 0.0
        %483 = vmatprep.subr.mxu0 0.0
        %484 = vmatpush1.msra.mxu0 0.0
        %485 = vmatprep.mubr.f32.mxu0 0.0
        %486 = vmatmul.mubr.f32.gmra.mrb[0].mxu0 %v375
        %v487 = vpop.f32.mrb[0].mxu0
        %v488 = vadd.f32 %v414, %v487
        %v489 = vpop.f32.mrb[0].mxu0
        %v490 = vadd.f32 %v418, %v489
        %491 = vmatprep.mubr.f32.mxu0 0.0
        %492 = vmatmul.mubr.f32.gmra.mrb[0].mxu0 %v376
        %v493 = vpop.f32.mrb[0].mxu0
        %v494 = vadd.f32 %v414, %v493
        %v495 = vpop.f32.mrb[0].mxu0
        %v496 = vadd.f32 %v418, %v495
        %497 = vdwg.mxu0
        %v498 = vmul.f32 %v488, 0.5
        %v499 = vmul.f32 %v490, 0.5
        %v500 = vmul.f32 %v494, 0.5
        %v501 = vmul.f32 %v496, 0.5
        %v502 = vmul.f32 %v488, 0.70710677
        %v503 = vmul.f32 %v490, 0.70710677
        %v504 = vmul.f32 %v494, 0.70710677
        %v505 = vmul.f32 %v496, 0.70710677
        %v506 = verf.f32.pop %v502
        %v507 = verf.f32.pop %v503
        %v508 = verf.f32.pop %v504
        %v509 = verf.f32.pop %v505
        %v510 = vadd.f32 %v506, 1.0
        %v511 = vadd.f32 %v507, 1.0
        %v512 = vadd.f32 %v508, 1.0
        %v513 = vadd.f32 %v509, 1.0
        %v514 = vmul.f32 %v498, %v510
        %v515 = vmul.f32 %v499, %v511
        %v516 = vmul.f32 %v500, %v512
        %v517 = vmul.f32 %v501, %v513
        %v518 = vld [vmem:[#allocation7] sm:$0xff]
        %v519 = vld [vmem:[#allocation7 + $0x8] sm:$0xff]
        %v520 = vld [vmem:[#allocation7 + $0x10] sm:$0xff]
        %v521 = vld [vmem:[#allocation7 + $0x18] sm:$0xff]
        %v522 = vld [vmem:[#allocation7 + $0x20] sm:$0xff]
        %v523 = vld [vmem:[#allocation7 + $0x28] sm:$0xff]
        %v524 = vld [vmem:[#allocation7 + $0x30] sm:$0xff]
        %v525 = vld [vmem:[#allocation7 + $0x38] sm:$0xff]
        %v526 = vld [vmem:[#allocation7 + $0x40] sm:$0xff]
        %v527 = vld [vmem:[#allocation7 + $0x48] sm:$0xff]
        %v528 = vld [vmem:[#allocation7 + $0x50] sm:$0xff]
        %v529 = vld [vmem:[#allocation7 + $0x58] sm:$0xff]
        %v530 = vld [vmem:[#allocation7 + $0x60] sm:$0xff]
        %v531 = vld [vmem:[#allocation7 + $0x68] sm:$0xff]
        %v532 = vld [vmem:[#allocation7 + $0x70] sm:$0xff]
        %v533 = vld [vmem:[#allocation7 + $0x78] sm:$0xff]
        %v534 = vld [vmem:[#allocation7 + $0x80] sm:$0xff]
        %v535 = vld [vmem:[#allocation7 + $0x88] sm:$0xff]
        %v536 = vld [vmem:[#allocation7 + $0x90] sm:$0xff]
        %v537 = vld [vmem:[#allocation7 + $0x98] sm:$0xff]
        %v538 = vld [vmem:[#allocation7 + $0xa0] sm:$0xff]
        %v539 = vld [vmem:[#allocation7 + $0xa8] sm:$0xff]
        %v540 = vld [vmem:[#allocation7 + $0xb0] sm:$0xff]
        %v541 = vld [vmem:[#allocation7 + $0xb8] sm:$0xff]
        %v542 = vld [vmem:[#allocation7 + $0xc0] sm:$0xff]
        %v543 = vld [vmem:[#allocation7 + $0xc8] sm:$0xff]
        %v544 = vld [vmem:[#allocation7 + $0xd0] sm:$0xff]
        %v545 = vld [vmem:[#allocation7 + $0xd8] sm:$0xff]
        %v546 = vld [vmem:[#allocation7 + $0xe0] sm:$0xff]
        %v547 = vld [vmem:[#allocation7 + $0xe8] sm:$0xff]
        %v548 = vld [vmem:[#allocation7 + $0xf0] sm:$0xff]
        %v549 = vld [vmem:[#allocation7 + $0xf8] sm:$0xff]
        %v550 = vld [vmem:[%s6] sm:$0x1]
        %v552 = vlaneseq
        %v553 = vshrl.u32 %v552, 7
        %v554 = vsub.s32 0, %v553
        %v555 = vrot.slane %v550, %v554
        %557 = vmatprep.subr.mxu0 0.0
        %558 = vmatpush1.msra.mxu0 %v518
        %559 = vmatprep.subr.mxu0 0.0
        %560 = vmatpush1.msra.mxu0 %v519
        %561 = vmatprep.subr.mxu0 0.0
        %562 = vmatpush1.msra.mxu0 %v520
        %563 = vmatprep.subr.mxu0 0.0
        %564 = vmatpush1.msra.mxu0 %v521
        %565 = vmatprep.subr.mxu0 0.0
        %566 = vmatpush1.msra.mxu0 %v522
        %567 = vmatprep.subr.mxu0 0.0
        %568 = vmatpush1.msra.mxu0 %v523
        %569 = vmatprep.subr.mxu0 0.0
        %570 = vmatpush1.msra.mxu0 %v524
        %571 = vmatprep.subr.mxu0 0.0
        %572 = vmatpush1.msra.mxu0 %v525
        %573 = vmatprep.subr.mxu0 0.0
        %574 = vmatpush1.msra.mxu0 %v526
        %575 = vmatprep.subr.mxu0 0.0
        %576 = vmatpush1.msra.mxu0 %v527
        %577 = vmatprep.subr.mxu0 0.0
        %578 = vmatpush1.msra.mxu0 %v528
        %579 = vmatprep.subr.mxu0 0.0
        %580 = vmatpush1.msra.mxu0 %v529
        %581 = vmatprep.subr.mxu0 0.0
        %582 = vmatpush1.msra.mxu0 %v530
        %583 = vmatprep.subr.mxu0 0.0
        %584 = vmatpush1.msra.mxu0 %v531
        %585 = vmatprep.subr.mxu0 0.0
        %586 = vmatpush1.msra.mxu0 %v532
        %587 = vmatprep.subr.mxu0 0.0
        %588 = vmatpush1.msra.mxu0 %v533
        %589 = vmatprep.subr.mxu0 0.0
        %590 = vmatpush1.msra.mxu0 %v534
        %591 = vmatprep.subr.mxu0 0.0
        %592 = vmatpush1.msra.mxu0 %v535
        %593 = vmatprep.subr.mxu0 0.0
        %594 = vmatpush1.msra.mxu0 %v536
        %595 = vmatprep.subr.mxu0 0.0
        %596 = vmatpush1.msra.mxu0 %v537
        %597 = vmatprep.subr.mxu0 0.0
        %598 = vmatpush1.msra.mxu0 %v538
        %599 = vmatprep.subr.mxu0 0.0
        %600 = vmatpush1.msra.mxu0 %v539
        %601 = vmatprep.subr.mxu0 0.0
        %602 = vmatpush1.msra.mxu0 %v540
        %603 = vmatprep.subr.mxu0 0.0
        %604 = vmatpush1.msra.mxu0 %v541
        %605 = vmatprep.subr.mxu0 0.0
        %606 = vmatpush1.msra.mxu0 %v542
        %607 = vmatprep.subr.mxu0 0.0
        %608 = vmatpush1.msra.mxu0 %v543
        %609 = vmatprep.subr.mxu0 0.0
        %610 = vmatpush1.msra.mxu0 %v544
        %611 = vmatprep.subr.mxu0 0.0
        %612 = vmatpush1.msra.mxu0 %v545
        %613 = vmatprep.subr.mxu0 0.0
        %614 = vmatpush1.msra.mxu0 %v546
        %615 = vmatprep.subr.mxu0 0.0
        %616 = vmatpush1.msra.mxu0 %v547
        %617 = vmatprep.subr.mxu0 0.0
        %618 = vmatpush1.msra.mxu0 %v548
        %619 = vmatprep.subr.mxu0 0.0
        %620 = vmatpush1.msra.mxu0 %v549
        %621 = vmatprep.mubr.f32.mxu0 %v515
        %622 = vmatmul.mubr.f32.gmra.mrb[0].mxu0 %v514
        %v623 = vpop.f32.mrb[0].mxu0
        %v624 = vadd.f32 %v555, %v623
        %v625 = vpop.f32.mrb[0].mxu0
        %626 = vmatprep.mubr.f32.mxu0 %v517
        %627 = vmatmul.mubr.f32.gmra.mrb[0].mxu0 %v516
        %v628 = vpop.f32.mrb[0].mxu0
        %v629 = vadd.f32 %v555, %v628
        %v630 = vpop.f32.mrb[0].mxu0
        %631 = vdwg.mxu0
        %632 = vst [vmem:[%s325] sm:$0xff] %v624
        %633 = vst [vmem:[%s325 + $0x8] sm:$0xff] %v629
        %s634 = sand.u32 %s185, 1
        %s635 = scalar_lea.sflag [#allocation4], %s634
        %s636 = sand.u32 %s185, 1
        %s637 = smul.addr %s636, 16
        %s638 = scalar_lea.vmem [#allocation8], %s637
        // Predicated region
        $region61: #{tpu_custom_call.1} parent=47 // pred_check
          %p639 = pneg %p195
        $region62: #{tpu_custom_call.1} parent=47 // pred_check_branch
          %641 = sbr.rel (%p639) target = $region64
        $region63: #{tpu_custom_call.1} parent=47 // pred_region
          %s642 = smul.u32 2, %s25
          %s644 = ssub.s32 256, 256
          %645 = vsyncadd %s635, %s644
          %s646 = smul.addr %s642, 128
          %s647 = scalar_lea.hbm %s7, %s646
          %s648 = sshll.u32 %s638, 4
          %s649 = int_to_ptr.vmem [resolvable:$true] %s648
          %654 = dma.vmem_to_hbm [thread:$0]  %s649, 256, %s647, %s635, 128, 128, 8
        $region64: #{tpu_custom_call.1} parent=47 // pred_fallthru
          _
      $region48: #{tpu_custom_call.1} parent=5 // pred_fallthru
        _
      %p655 = scmp.le.s32.totalorder 2, %s20
      // Predicated region
      $region65: #{tpu_custom_call.1} parent=5 // pred_check
        %p656 = pneg %p655
      $region66: #{tpu_custom_call.1} parent=5 // pred_check_branch
        %658 = sbr.rel (%p656) target = $region68
      $region67: #{tpu_custom_call.1} parent=5 // pred_region
        %s659 = ssub.s32 %s20, 2
        // Predicated region
        $region69: #{tpu_custom_call.1} parent=67 // pred_check
          %p660 = pneg %p201
        $region70: #{tpu_custom_call.1} parent=67 // pred_check_branch
          %662 = sbr.rel (%p660) target = $region72
        $region71: #{tpu_custom_call.1} parent=67 // pred_region
          %s663 = sand.u32 %s186, 1
          %s664 = scalar_lea.sflag [#allocation4], %s663
          %s665 = sand.u32 %s186, 1
          %s666 = smul.addr %s665, 16
          %s667 = scalar_lea.vmem [#allocation8], %s666
          %668 = dma.done %s664, 256
        $region72: #{tpu_custom_call.1} parent=67 // pred_fallthru
          _
      $region68: #{tpu_custom_call.1} parent=5 // pred_fallthru
        _
    $region6: #{tpu_custom_call.1} parent=1 // loop_footer
      %s24 = sadd.s32 1, %s20
    $region7: #{tpu_custom_call.1} parent=1 // loop_footer_branch
      %19 = sbr.rel target = $region3
    $region8: #{tpu_custom_call.1} parent=1 // loop_exit
      _
    %669 = vsyncpa [#allocation3], 1
    %s670 = scalar_lea.sflag [#allocation3], 1
    %671 = vsyncpa %s670, 1
    %672 = vsyncpa [#allocation6], 1
    %673 = vsyncpa [#allocation4], 1
    %s674 = scalar_lea.sflag [#allocation4], 1
    %675 = vsyncpa %s674, 1

</llo_original>
